<compile_context>
chip_gen: v7x
topology: tpu7x:2x2x1
jax: 0.10.0
libtpu: 0.0.40
codegen_flags: <defaults>
</compile_context>

<pallas_src>
import functools

import jax
import jax.numpy as jnp
from jax.experimental import pallas as pl
from jax.experimental.pallas import tpu as pltpu

_LANE = 128
_SUBLANE = 8
# 2048 rows x 128 lanes x 4 B = 1 MiB per f32 buffer.  With x triple-buffered
# and spike/mem double-buffered the footprint is < 10 MiB -> comfortably inside
# the explicit 32 MiB scoped-VMEM limit on every generation (v7x included).
_MAX_BLOCK_ROWS = 2048
_VMEM_LIMIT_BYTES = 32 * 1024 * 1024


def _round_up(n, m):
    return ((n + m - 1) // m) * m


def _pick_block_rows(rows):
    """Row-tile size: sublane-full, capped, split >=2 ways for v7x megacore."""
    rows8 = _round_up(max(rows, 1), _SUBLANE)
    if rows8 >= 2 * _SUBLANE:
        # Guarantee at least two tiles on the 'parallel' row axis so the second
        # TensorCore on v7x is never idle (single-TC v5e/v6e are unaffected).
        target = _round_up(pl.cdiv(rows8, 2), _SUBLANE)
    else:
        target = rows8
    return max(_SUBLANE, min(target, _MAX_BLOCK_ROWS))


def _buffered_spec(block_shape, index_map, buffers):
    """BlockSpec with an explicit pipeline depth; falls back if unsupported."""
    try:
        return pl.BlockSpec(block_shape, index_map,
                            pipeline_mode=pl.Buffered(buffers))
    except (AttributeError, TypeError):
        return pl.BlockSpec(block_shape, index_map)


# --------------------------------------------------------------------------
# Single-step kernel (matches the PyTorch forward exactly).
# --------------------------------------------------------------------------
def _spiking_step_kernel(x_ref, mem_ref, spike_ref, mem_out_ref, *,
                         threshold, decay):
    mem = mem_ref[...] + x_ref[...].astype(jnp.float32)
    fire = mem >= threshold
    spike_ref[...] = jnp.where(fire, 1.0, 0.0).astype(spike_ref.dtype)
    # mem * (1 - spike) * decay  ==  select(fire, 0, mem * decay): 1 sel + 1 mul
    mem_out_ref[...] = jnp.where(fire, 0.0, mem * decay)


def spiking_neuron_forward(x, mem, *, threshold=1.0, decay=0.9):
    """One SpikingNeuron step.  Returns (spike, new_mem).

    spike has x's shape/dtype; new_mem is the float32 membrane accumulator.
    NOTE: for T > 1 timesteps use spiking_neuron_multistep instead of looping
    this function — it keeps the membrane state resident in VMEM across all
    steps (half the HBM traffic, no per-step dispatch or pad/slice).
    """
    orig_shape = x.shape
    total = x.size
    pad = (-total) % _LANE
    rows = (total + pad) // _LANE

    x_flat = x.reshape(total)
    m_flat = mem.reshape(total).astype(jnp.float32)
    if pad:  # only when numel isn't lane-aligned; pads < 128 elements.
        x_flat = jnp.pad(x_flat, (0, pad))
        m_flat = jnp.pad(m_flat, (0, pad))
    x2 = x_flat.reshape(rows, _LANE)
    m2 = m_flat.reshape(rows, _LANE)

    block_rows = _pick_block_rows(rows)
    grid = (pl.cdiv(rows, block_rows),)  # ragged last tile handled by Pallas

    kernel = functools.partial(_spiking_step_kernel,
                               threshold=threshold, decay=decay)
    spike2, mem_out2 = pl.pallas_call(
        kernel,
        out_shape=(
            jax.ShapeDtypeStruct((rows, _LANE), x.dtype),
            jax.ShapeDtypeStruct((rows, _LANE), jnp.float32),
        ),
        grid=grid,
        in_specs=[
            pl.BlockSpec((block_rows, _LANE), lambda i: (i, 0)),
            pl.BlockSpec((block_rows, _LANE), lambda i: (i, 0)),
        ],
        out_specs=(
            pl.BlockSpec((block_rows, _LANE), lambda i: (i, 0)),
            pl.BlockSpec((block_rows, _LANE), lambda i: (i, 0)),
        ),
        input_output_aliases={1: 1},  # membrane state updates in place
        compiler_params=pltpu.CompilerParams(
            dimension_semantics=("parallel",),
            vmem_limit_bytes=_VMEM_LIMIT_BYTES),
    )(x2, m2)

    if pad:
        spike = spike2.reshape(rows * _LANE)[:total].reshape(orig_shape)
        new_mem = mem_out2.reshape(rows * _LANE)[:total].reshape(orig_shape)
    else:
        spike = spike2.reshape(orig_shape)
        new_mem = mem_out2.reshape(orig_shape)
    return spike, new_mem


# --------------------------------------------------------------------------
# Fused multi-timestep kernel: membrane state lives in VMEM across all T steps.
# --------------------------------------------------------------------------
def _spiking_multistep_kernel(x_ref, mem_in_ref, spike_ref, mem_out_ref, *,
                              threshold, decay):
    # CORRECTNESS INVARIANT: the time axis must be the innermost grid axis,
    # marked "arbitrary", and mem_out's block index must be constant across t.
    # The mem_out block then stays VMEM-resident and acts as the membrane
    # accumulator for all T steps of this row tile; it is written back to HBM
    # only when the row tile changes / the grid ends.
    t = pl.program_id(1)

    @pl.when(t == 0)
    def _():
        mem_out_ref[...] = mem_in_ref[...]

    mem = mem_out_ref[...] + x_ref[...].astype(jnp.float32)
    fire = mem >= threshold
    spike_ref[...] = jnp.where(fire, 1.0, 0.0).astype(spike_ref.dtype)
    mem_out_ref[...] = jnp.where(fire, 0.0, mem * decay)


def spiking_neuron_multistep(xs, mem, *, threshold=1.0, decay=0.9):
    """Runs T SpikingNeuron steps in one pallas_call.

    Args:
      xs:  (T, ...) stacked inputs (any float dtype; spikes keep this dtype).
      mem: (...)    initial membrane potential.
    Returns:
      (spikes (T, ...) in xs.dtype, final_mem (...) in float32).
    """
    T = xs.shape[0]
    per_shape = xs.shape[1:]
    total = 1
    for d in per_shape:
        total *= d
    pad = (-total) % _LANE
    rows = (total + pad) // _LANE

    xs_flat = xs.reshape(T, total)
    mem_flat = mem.reshape(total).astype(jnp.float32)
    if pad:
        # Only hit when the per-step element count isn't a multiple of 128;
        # costs one extra copy of xs (pads < 128 elements per step).
        xs_flat = jnp.pad(xs_flat, ((0, 0), (0, pad)))
        mem_flat = jnp.pad(mem_flat, (0, pad))
    xs3 = xs_flat.reshape(T, rows, _LANE)
    m2 = mem_flat.reshape(rows, _LANE)

    block_rows = _pick_block_rows(rows)
    # Row tiles (parallel, shards across TCs) x time (stateful, innermost).
    grid = (pl.cdiv(rows, block_rows), T)

    kernel = functools.partial(_spiking_multistep_kernel,
                               threshold=threshold, decay=decay)
    spikes3, mem_out2 = pl.pallas_call(
        kernel,
        out_shape=(
            jax.ShapeDtypeStruct((T, rows, _LANE), xs.dtype),
            jax.ShapeDtypeStruct((rows, _LANE), jnp.float32),
        ),
        grid=grid,
        in_specs=[
            # x[t] tile (leading T squeezed), triple-buffered so the small
            # per-timestep read DMAs stay back-to-back.
            _buffered_spec((None, block_rows, _LANE),
                           lambda r, t: (t, r, 0), buffers=3),
            # Initial membrane: constant block across t -> fetched once per
            # row tile.
            pl.BlockSpec((block_rows, _LANE), lambda r, t: (r, 0)),
        ],
        out_specs=(
            pl.BlockSpec((None, block_rows, _LANE), lambda r, t: (t, r, 0)),
            # VMEM-resident membrane accumulator (same block for every t).
            pl.BlockSpec((block_rows, _LANE), lambda r, t: (r, 0)),
        ),
        input_output_aliases={1: 1},
        compiler_params=pltpu.CompilerParams(
            dimension_semantics=("parallel", "arbitrary"),
            vmem_limit_bytes=_VMEM_LIMIT_BYTES),
    )(xs3, m2)

    if pad:
        spikes = spikes3.reshape(T, rows * _LANE)[:, :total].reshape((T,) + per_shape)
        final_mem = mem_out2.reshape(rows * _LANE)[:total].reshape(per_shape)
    else:
        spikes = spikes3.reshape((T,) + per_shape)
        final_mem = mem_out2.reshape(per_shape)
    return spikes, final_mem


# --------------------------------------------------------------------------
# Pure-JAX references (mirror the PyTorch module exactly).
# --------------------------------------------------------------------------
def _reference_forward(x, mem, threshold=1.0, decay=0.9):
    mem = mem + x
    spike = (mem >= threshold).astype(x.dtype)
    return spike, mem * (1.0 - spike) * decay


def _reference_multistep(xs, mem, threshold=1.0, decay=0.9):
    def step(m, x):
        s, m_new = _reference_forward(x, m, threshold, decay)
        return m_new, s
    mem_final, spikes = jax.lax.scan(step, mem, xs)
    return spikes, mem_final


if __name__ == "__main__":
    key = jax.random.PRNGKey(0)
    x = jax.random.normal(key, (2, 4, 16, 16), dtype=jnp.float32) * 1.5
    mem0 = jnp.zeros_like(x)  # module initializes membrane_potential = 0

    # --- single step (the nn.Module forward) ---
    spike, mem1 = spiking_neuron_forward(x, mem0, threshold=1.0, decay=0.9)
    jax.block_until_ready((spike, mem1))
    spike_ref, mem1_ref = _reference_forward(x, mem0)
    assert spike.shape == x.shape and spike.dtype == x.dtype
    assert jnp.array_equal(spike, spike_ref)
    assert jnp.allclose(mem1, mem1_ref, atol=1e-6)

    # --- second step exercises threading of the state ---
    x2 = jax.random.normal(jax.random.PRNGKey(1), (2, 4, 16, 16), jnp.float32) * 1.5
    spike2, mem2 = spiking_neuron_forward(x2, mem1, threshold=1.0, decay=0.9)
    jax.block_until_ready((spike2, mem2))
    spike2_ref, mem2_ref = _reference_forward(x2, mem1_ref)
    assert jnp.array_equal(spike2, spike2_ref)
    assert jnp.allclose(mem2, mem2_ref, atol=1e-6)

    # --- fused T-step kernel (membrane resident in VMEM across all steps) ---
    T = 8
    xs = jax.random.normal(jax.random.PRNGKey(2), (T, 2, 4, 16, 16), jnp.float32) * 1.5
    spikes_k, mem_k = spiking_neuron_multistep(xs, mem0, threshold=1.0, decay=0.9)
    jax.block_until_ready((spikes_k, mem_k))
    spikes_r, mem_r = _reference_multistep(xs, mem0, 1.0, 0.9)
    assert spikes_k.shape == (T, 2, 4, 16, 16)
    assert jnp.array_equal(spikes_k, spikes_r)
    assert jnp.allclose(mem_k, mem_r, atol=1e-5)

    print("KERNEL_OK")
</pallas_src>

<mosaic_0001>
module attributes {stable_mosaic.version = 11 : i64} {
  func.func @_spiking_step_kernel(%arg0: i32, %arg1: memref<8x128xf32, #tpu.memory_space<vmem>>, %arg2: memref<8x128xf32, #tpu.memory_space<vmem>>, %arg3: memref<8x128xf32, #tpu.memory_space<vmem>>, %arg4: memref<8x128xf32, #tpu.memory_space<vmem>>) attributes {dimension_semantics = [#tpu.dimension_semantics<parallel>], iteration_bounds = array<i64: 2>, scalar_prefetch = 0 : i64, scratch_operands = 0 : i64, tpu.core_type = #tpu.core_type<tc>, window_params = [{transform_indices = @transform_0, window_bounds = array<i64: 8, 128>}, {transform_indices = @transform_1, window_bounds = array<i64: 8, 128>}, {transform_indices = @transform_2, window_bounds = array<i64: 8, 128>}, {transform_indices = @transform_3, window_bounds = array<i64: 8, 128>}]} {
    %c0 = arith.constant 0 : index
    %c0_0 = arith.constant 0 : index
    %0 = vector.load %arg2[%c0, %c0_0] : memref<8x128xf32, #tpu.memory_space<vmem>>, vector<8x128xf32>
    %c0_1 = arith.constant 0 : index
    %c0_2 = arith.constant 0 : index
    %1 = vector.load %arg1[%c0_1, %c0_2] : memref<8x128xf32, #tpu.memory_space<vmem>>, vector<8x128xf32>
    %2 = arith.addf %0, %1 : vector<8x128xf32>
    %cst = arith.constant 1.000000e+00 : f32
    %3 = vector.broadcast %cst : f32 to vector<8x128xf32>
    %4 = arith.cmpf oge, %2, %3 : vector<8x128xf32>
    %cst_3 = arith.constant 1.000000e+00 : f32
    %cst_4 = arith.constant 0.000000e+00 : f32
    %5 = vector.broadcast %cst_3 : f32 to vector<8x128xf32>
    %6 = vector.broadcast %cst_4 : f32 to vector<8x128xf32>
    %7 = arith.select %4, %5, %6 : vector<8x128xi1>, vector<8x128xf32>
    %c0_5 = arith.constant 0 : index
    %c0_6 = arith.constant 0 : index
    %8 = vector.load %arg3[%c0_5, %c0_6] : memref<8x128xf32, #tpu.memory_space<vmem>>, vector<8x128xf32>
    tpu.vector_store %arg3[%c0_5, %c0_6], %7 {strides = array<i32>} : memref<8x128xf32, #tpu.memory_space<vmem>>, vector<8x128xf32>,
    %cst_7 = arith.constant 0.899999976 : f32
    %9 = vector.broadcast %cst_7 : f32 to vector<8x128xf32>
    %10 = arith.mulf %2, %9 : vector<8x128xf32>
    %cst_8 = arith.constant 0.000000e+00 : f32
    %11 = vector.broadcast %cst_8 : f32 to vector<8x128xf32>
    %12 = arith.select %4, %11, %10 : vector<8x128xi1>, vector<8x128xf32>
    %c0_9 = arith.constant 0 : index
    %c0_10 = arith.constant 0 : index
    %13 = vector.load %arg4[%c0_9, %c0_10] : memref<8x128xf32, #tpu.memory_space<vmem>>, vector<8x128xf32>
    tpu.vector_store %arg4[%c0_9, %c0_10], %12 {strides = array<i32>} : memref<8x128xf32, #tpu.memory_space<vmem>>, vector<8x128xf32>,
    return
  }
  func.func @transform_0(%arg0: i32) -> (i32, i32) {
    %c0_i32 = arith.constant 0 : i32
    %c0_i32_0 = arith.constant 0 : i32
    return %arg0, %c0_i32 : i32, i32
  }
  func.func @transform_1(%arg0: i32) -> (i32, i32) {
    %c0_i32 = arith.constant 0 : i32
    %c0_i32_0 = arith.constant 0 : i32
    return %arg0, %c0_i32 : i32, i32
  }
  func.func @transform_2(%arg0: i32) -> (i32, i32) {
    %c0_i32 = arith.constant 0 : i32
    %c0_i32_0 = arith.constant 0 : i32
    return %arg0, %c0_i32 : i32, i32
  }
  func.func @transform_3(%arg0: i32) -> (i32, i32) {
    %c0_i32 = arith.constant 0 : i32
    %c0_i32_0 = arith.constant 0 : i32
    return %arg0, %c0_i32 : i32, i32
  }
}

</mosaic_0001>

<llo_original>
// kernel: tpu_custom_call.1
$region0: #{tpu_custom_call.1}
  #allocation0 [shape = 'u32[]', space=smem, size = 0x4, offset = 0x4, fixed_abs, tag = 'smem constant byte address 0x4 - core index']
  #allocation1 [shape = 'u32[144,128]{1,0:T(1,128)}', space=vmem, size = 0x12000, scoped, tag = 'internal scratch']
  %s0 = inlined_call_operand.vmem [shape: f32[16,128], index: 0, kind: input, shape index: {}]
  %s1 = inlined_call_operand.hbm [shape: f32[16,128], index: 1, kind: input, shape index: {}, may-alias: {1,3}]
  %s2 = inlined_call_operand.hbm [shape: f32[16,128], index: 2, kind: output, shape index: {0}]
  %s3 = inlined_call_operand.hbm [shape: f32[16,128], index: 3, kind: output, shape index: {1}, may-alias: {1,3}]
  %4 = xla_tuple %s2, %s3
  %s5 = sld [smem:[#allocation0]]
  $region53: #{tpu_custom_call.1} parent=0
    _
  %s7 = ssub.s32 1, %s5
  %s8 = scalar_select 0, %s7, %s5
  $region1: #{tpu_custom_call.1} parent=0
    #allocation2 [shape = 'u8[8192]{0}', space=vmem, size = 0x2000, scoped, tag = 'input window, operand 1']
    #allocation3 [shape = 's32[2]{0}', space=sflag, size = 0x8, scoped, tag = 'scoped memory for tpu_custom_call.1']
    #allocation4 [shape = 's32[2]{0}', space=sflag, size = 0x8, scoped, tag = 'scoped memory for tpu_custom_call.1']
    #allocation5 [shape = 'u8[8192]{0}', space=vmem, size = 0x2000, scoped, tag = 'output window, operand 0']
    #allocation6 [shape = 'u8[8192]{0}', space=vmem, size = 0x2000, scoped, tag = 'output window, operand 1']
    #allocation7 [shape = 's32[2]{0}', space=sflag, size = 0x8, scoped, tag = 'scoped memory for tpu_custom_call.1']
    %9 = vsyncpa [#allocation3], 0
    %s10 = scalar_lea.sflag [#allocation3], 1
    %11 = vsyncpa %s10, 0
    %12 = vsyncpa [#allocation4], 0
    %s13 = scalar_lea.sflag [#allocation4], 1
    %14 = vsyncpa %s13, 0
    %15 = vsyncpa [#allocation7], 0
    %s16 = scalar_lea.sflag [#allocation7], 1
    %17 = vsyncpa %s16, 0
    loop: start=0, step=1, limit=4
    $region2: #{tpu_custom_call.1} parent=1 // loop_pre_header
      _
    $region3: #{tpu_custom_call.1} parent=1 // loop_header
      %s19 = sphi 0, %s23
      %p20 = scmp.ge.s32.totalorder %s19, 4
      %s29 = sphi 0, %s31
      %s32 = sphi 0, %s29
      %s33 = sphi 0, %s32
      %s49 = sphi 0, %s33
      %s55 = sphi 0, %s57
      %s58 = sphi 0, %s55
      %s59 = sphi 0, %s58
      %s75 = sphi 0, %s59
      %s81 = sphi 0, %s83
      %s84 = sphi 0, %s81
      %s85 = sphi 0, %s84
      %s101 = sphi 0, %s85
      %s107 = sphi 0, %s109
      %s110 = sphi 0, %s107
      %s111 = sphi 0, %s110
      %s127 = sphi 0, %s111
    $region4: #{tpu_custom_call.1} parent=1 // loop_header_branch
      %22 = sbr.rel (%p20) target = $region8
    $region5: #{tpu_custom_call.1} parent=1 // loop_body
      %s24 = ssub.s32 %s19, 1
      %s25 = ssub.s32 %s19, 2
      %s26 = sadd.s32 %s19, 1
      %s27 = ssub.s32 %s19, %s26
      %p28 = scmp.eq.s32.totalorder %s27, 0
      %s30 = sadd.s32 %s29, 1
      %s31 = scalar_select %p28, %s29, %s30
      %p34 = pneg %p28
      %p35 = scmp.eq.s32.totalorder %s19, 1
      %p36 = por %p34, %p35
      %p37 = scmp.ne.s32.totalorder %s29, %s32
      %p38 = scmp.eq.s32.totalorder %s19, 0
      %p39 = por %p37, %p38
      %p40 = scmp.ne.s32.totalorder %s29, %s32
      %p41 = scmp.eq.s32.totalorder %s24, 1
      %p42 = por %p40, %p41
      %p43 = scmp.ne.s32.totalorder %s32, %s33
      %p44 = scmp.eq.s32.totalorder %s24, 0
      %p45 = por %p43, %p44
      %p46 = scmp.ne.s32.totalorder %s32, %s33
      %p47 = scmp.eq.s32.totalorder %s25, 1
      %p48 = por %p46, %p47
      %p50 = scmp.ne.s32.totalorder %s33, %s49
      %p51 = scmp.eq.s32.totalorder %s25, 0
      %p52 = por %p50, %p51
      %s53 = ssub.s32 %s19, %s26
      %p54 = scmp.eq.s32.totalorder %s53, 0
      %s56 = sadd.s32 %s55, 1
      %s57 = scalar_select %p54, %s55, %s56
      %p60 = pneg %p54
      %p61 = scmp.eq.s32.totalorder %s19, 1
      %p62 = por %p60, %p61
      %p63 = scmp.ne.s32.totalorder %s55, %s58
      %p64 = scmp.eq.s32.totalorder %s19, 0
      %p65 = por %p63, %p64
      %p66 = scmp.ne.s32.totalorder %s55, %s58
      %p67 = scmp.eq.s32.totalorder %s24, 1
      %p68 = por %p66, %p67
      %p69 = scmp.ne.s32.totalorder %s58, %s59
      %p70 = scmp.eq.s32.totalorder %s24, 0
      %p71 = por %p69, %p70
      %p72 = scmp.ne.s32.totalorder %s58, %s59
      %p73 = scmp.eq.s32.totalorder %s25, 1
      %p74 = por %p72, %p73
      %p76 = scmp.ne.s32.totalorder %s59, %s75
      %p77 = scmp.eq.s32.totalorder %s25, 0
      %p78 = por %p76, %p77
      %s79 = ssub.s32 %s19, %s26
      %p80 = scmp.eq.s32.totalorder %s79, 0
      %s82 = sadd.s32 %s81, 1
      %s83 = scalar_select %p80, %s81, %s82
      %p86 = pneg %p80
      %p87 = scmp.eq.s32.totalorder %s19, 1
      %p88 = por %p86, %p87
      %p89 = scmp.ne.s32.totalorder %s81, %s84
      %p90 = scmp.eq.s32.totalorder %s19, 0
      %p91 = por %p89, %p90
      %p92 = scmp.ne.s32.totalorder %s81, %s84
      %p93 = scmp.eq.s32.totalorder %s24, 1
      %p94 = por %p92, %p93
      %p95 = scmp.ne.s32.totalorder %s84, %s85
      %p96 = scmp.eq.s32.totalorder %s24, 0
      %p97 = por %p95, %p96
      %p98 = scmp.ne.s32.totalorder %s84, %s85
      %p99 = scmp.eq.s32.totalorder %s25, 1
      %p100 = por %p98, %p99
      %p102 = scmp.ne.s32.totalorder %s85, %s101
      %p103 = scmp.eq.s32.totalorder %s25, 0
      %p104 = por %p102, %p103
      %s105 = ssub.s32 %s19, %s26
      %p106 = scmp.eq.s32.totalorder %s105, 0
      %s108 = sadd.s32 %s107, 1
      %s109 = scalar_select %p106, %s107, %s108
      %p112 = pneg %p106
      %p113 = scmp.eq.s32.totalorder %s19, 1
      %p114 = por %p112, %p113
      %p115 = scmp.ne.s32.totalorder %s107, %s110
      %p116 = scmp.eq.s32.totalorder %s19, 0
      %p117 = por %p115, %p116
      %p118 = scmp.ne.s32.totalorder %s107, %s110
      %p119 = scmp.eq.s32.totalorder %s24, 1
      %p120 = por %p118, %p119
      %p121 = scmp.ne.s32.totalorder %s110, %s111
      %p122 = scmp.eq.s32.totalorder %s24, 0
      %p123 = por %p121, %p122
      %p124 = scmp.ne.s32.totalorder %s110, %s111
      %p125 = scmp.eq.s32.totalorder %s25, 1
      %p126 = por %p124, %p125
      %p128 = scmp.ne.s32.totalorder %s111, %s127
      %p129 = scmp.eq.s32.totalorder %s25, 0
      %p130 = por %p128, %p129
      %p131 = scmp.le.s32.totalorder 1, %s19
      %p132 = scmp.lt.s32.totalorder %s19, 3
      %p133 = pnand %p131, %p132
      %p134 = pneg %p133
      // Predicated region
      $region9: #{tpu_custom_call.1} parent=5 // pred_check
        _
      $region10: #{tpu_custom_call.1} parent=5 // pred_check_branch
        %136 = sbr.rel (%p133) target = $region12
      $region11: #{tpu_custom_call.1} parent=5 // pred_region
        %s137 = ssub.s32 %s19, 1
      $region12: #{tpu_custom_call.1} parent=5 // pred_fallthru
        _
      %p138 = scmp.lt.s32.totalorder %s19, 2
      // Predicated region
      $region13: #{tpu_custom_call.1} parent=5 // pred_check
        %p139 = pneg %p138
      $region14: #{tpu_custom_call.1} parent=5 // pred_check_branch
        %141 = sbr.rel (%p139) target = $region16
      $region15: #{tpu_custom_call.1} parent=5 // pred_region
        // Predicated region
        $region17: #{tpu_custom_call.1} parent=15 // pred_check
          %p142 = pneg %p39
        $region18: #{tpu_custom_call.1} parent=15 // pred_check_branch
          %144 = sbr.rel (%p142) target = $region20
        $region19: #{tpu_custom_call.1} parent=15 // pred_region
          %p145 = scmp.lt.s32.totalorder %s19, 1
          %s146 = scalar_select %p145, %s19, 1
          %s147 = smul.addr %s146, 8
          %s148 = scalar_lea.vmem %s0, %s147
        $region20: #{tpu_custom_call.1} parent=15 // pred_fallthru
          _
        // Predicated region
        $region21: #{tpu_custom_call.1} parent=15 // pred_check
          %p149 = pneg %p65
        $region22: #{tpu_custom_call.1} parent=15 // pred_check_branch
          %151 = sbr.rel (%p149) target = $region24
        $region23: #{tpu_custom_call.1} parent=15 // pred_region
          %s152 = sand.u32 %s55, 1
          %s153 = scalar_lea.sflag [#allocation3], %s152
          %s154 = sand.u32 %s55, 1
          %s155 = smul.addr %s154, 8
          %s156 = scalar_lea.vmem [#allocation2], %s155
          %s158 = ssub.s32 128, 128
          %159 = vsyncadd %s153, %s158
          %s160 = smul.addr %s19, 128
          %s161 = scalar_lea.hbm %s1, %s160
          %s163 = sshll.u32 %s156, 4
          %s164 = int_to_ptr.vmem [resolvable:$true] %s163
          %166 = dma.hbm_to_vmem [thread:$0]  %s161, 128, %s164, %s153
        $region24: #{tpu_custom_call.1} parent=15 // pred_fallthru
          _
      $region16: #{tpu_custom_call.1} parent=5 // pred_fallthru
        _
      %p167 = scmp.le.s32.totalorder 1, %s19
      %p168 = scmp.lt.s32.totalorder %s19, 3
      %p169 = pnand %p167, %p168
      %p170 = pneg %p169
      // Predicated region
      $region25: #{tpu_custom_call.1} parent=5 // pred_check
        _
      $region26: #{tpu_custom_call.1} parent=5 // pred_check_branch
        %172 = sbr.rel (%p169) target = $region28
      $region27: #{tpu_custom_call.1} parent=5 // pred_region
        %s173 = ssub.s32 %s19, 1
        %s174 = sand.u32 %s58, 1
        %s175 = scalar_lea.sflag [#allocation3], %s174
        %s176 = sand.u32 %s58, 1
        %s177 = smul.addr %s176, 8
        %s178 = scalar_lea.vmem [#allocation2], %s177
        // Predicated region
        $region29: #{tpu_custom_call.1} parent=27 // pred_check
          %p179 = pneg %p71
        $region30: #{tpu_custom_call.1} parent=27 // pred_check_branch
          %181 = sbr.rel (%p179) target = $region32
        $region31: #{tpu_custom_call.1} parent=27 // pred_region
          %182 = dma.done %s175, 128
        $region32: #{tpu_custom_call.1} parent=27 // pred_fallthru
          _
        %p183 = scmp.lt.s32.totalorder %s24, 1
        %s184 = scalar_select %p183, %s24, 1
        %s185 = smul.addr %s184, 8
        %s186 = scalar_lea.vmem %s0, %s185
        %p187 = pneg %p45
        %p188 = pneg %p42
        %s189 = sand.u32 %s58, 1
        %s190 = scalar_lea.sflag [#allocation3], %s189
        %s191 = sand.u32 %s58, 1
        %s192 = smul.addr %s191, 8
        %s193 = scalar_lea.vmem [#allocation2], %s192
        %p194 = pneg %p71
        %p195 = pneg %p68
        %p196 = pneg %p97
        %p197 = pneg %p94
        %s198 = sand.u32 %s84, 1
        %s199 = scalar_lea.sflag [#allocation4], %s198
        %s200 = sand.u32 %s84, 1
        %s201 = smul.addr %s200, 8
        %s202 = scalar_lea.vmem [#allocation5], %s201
        %p203 = pneg %p123
        %p204 = pneg %p120
        %s205 = sand.u32 %s110, 1
        %s206 = scalar_lea.sflag [#allocation7], %s205
        %s207 = sand.u32 %s110, 1
        %s208 = smul.addr %s207, 8
        %s209 = scalar_lea.vmem [#allocation6], %s208
        %p210 = scmp.lt.s32.totalorder %s24, 1
        %s211 = scalar_select %p210, %s24, 1
        %s212 = smul.addr %s211, 8
        %s213 = scalar_lea.vmem %s0, %s212
        %v214 = vld [vmem:[%s178] sm:$0xff]
        %v215 = vld [vmem:[%s213] sm:$0xff]
        %v216 = vadd.f32 %v214, %v215
        %vm217 = vcmp.ge.f32.partialorder %v216, 1.0
        %v218 = vsel %vm217, 1.0, 0.0
        %219 = vst [vmem:[%s202] sm:$0xff] %v218
        %v220 = vmul.f32 %v216, 0.9
        %v221 = vsel %vm217, 0.0, %v220
        %222 = vst [vmem:[%s209] sm:$0xff] %v221
        %s223 = sand.u32 %s84, 1
        %s224 = scalar_lea.sflag [#allocation4], %s223
        %s225 = sand.u32 %s84, 1
        %s226 = smul.addr %s225, 8
        %s227 = scalar_lea.vmem [#allocation5], %s226
        %s228 = sand.u32 %s110, 1
        %s229 = scalar_lea.sflag [#allocation7], %s228
        %s230 = sand.u32 %s110, 1
        %s231 = smul.addr %s230, 8
        %s232 = scalar_lea.vmem [#allocation6], %s231
        // Predicated region
        $region33: #{tpu_custom_call.1} parent=27 // pred_check
          %p233 = pneg %p94
        $region34: #{tpu_custom_call.1} parent=27 // pred_check_branch
          %235 = sbr.rel (%p233) target = $region36
        $region35: #{tpu_custom_call.1} parent=27 // pred_region
          %s237 = ssub.s32 128, 128
          %238 = vsyncadd %s224, %s237
          %s239 = smul.addr %s24, 128
          %s240 = scalar_lea.hbm %s2, %s239
          %s242 = sshll.u32 %s227, 4
          %s243 = int_to_ptr.vmem [resolvable:$true] %s242
          %245 = dma.vmem_to_hbm [thread:$0]  %s243, 128, %s240, %s224
        $region36: #{tpu_custom_call.1} parent=27 // pred_fallthru
          _
        // Predicated region
        $region37: #{tpu_custom_call.1} parent=27 // pred_check
          %p246 = pneg %p120
        $region38: #{tpu_custom_call.1} parent=27 // pred_check_branch
          %248 = sbr.rel (%p246) target = $region40
        $region39: #{tpu_custom_call.1} parent=27 // pred_region
          %s250 = ssub.s32 128, 128
          %251 = vsyncadd %s229, %s250
          %s252 = smul.addr %s24, 128
          %s253 = scalar_lea.hbm %s3, %s252
          %s255 = sshll.u32 %s232, 4
          %s256 = int_to_ptr.vmem [resolvable:$true] %s255
          %258 = dma.vmem_to_hbm [thread:$0]  %s256, 128, %s253, %s229
        $region40: #{tpu_custom_call.1} parent=27 // pred_fallthru
          _
      $region28: #{tpu_custom_call.1} parent=5 // pred_fallthru
        _
      %p259 = scmp.le.s32.totalorder 2, %s19
      // Predicated region
      $region41: #{tpu_custom_call.1} parent=5 // pred_check
        %p260 = pneg %p259
      $region42: #{tpu_custom_call.1} parent=5 // pred_check_branch
        %262 = sbr.rel (%p260) target = $region44
      $region43: #{tpu_custom_call.1} parent=5 // pred_region
        %s263 = ssub.s32 %s19, 2
        // Predicated region
        $region45: #{tpu_custom_call.1} parent=43 // pred_check
          %p264 = pneg %p100
        $region46: #{tpu_custom_call.1} parent=43 // pred_check_branch
          %266 = sbr.rel (%p264) target = $region48
        $region47: #{tpu_custom_call.1} parent=43 // pred_region
          %s267 = sand.u32 %s85, 1
          %s268 = scalar_lea.sflag [#allocation4], %s267
          %s269 = sand.u32 %s85, 1
          %s270 = smul.addr %s269, 8
          %s271 = scalar_lea.vmem [#allocation5], %s270
          %272 = dma.done %s268, 128
        $region48: #{tpu_custom_call.1} parent=43 // pred_fallthru
          _
        // Predicated region
        $region49: #{tpu_custom_call.1} parent=43 // pred_check
          %p273 = pneg %p126
        $region50: #{tpu_custom_call.1} parent=43 // pred_check_branch
          %275 = sbr.rel (%p273) target = $region52
        $region51: #{tpu_custom_call.1} parent=43 // pred_region
          %s276 = sand.u32 %s111, 1
          %s277 = scalar_lea.sflag [#allocation7], %s276
          %s278 = sand.u32 %s111, 1
          %s279 = smul.addr %s278, 8
          %s280 = scalar_lea.vmem [#allocation6], %s279
          %281 = dma.done %s277, 128
        $region52: #{tpu_custom_call.1} parent=43 // pred_fallthru
          _
      $region44: #{tpu_custom_call.1} parent=5 // pred_fallthru
        _
    $region6: #{tpu_custom_call.1} parent=1 // loop_footer
      %s23 = sadd.s32 1, %s19
    $region7: #{tpu_custom_call.1} parent=1 // loop_footer_branch
      %18 = sbr.rel target = $region3
    $region8: #{tpu_custom_call.1} parent=1 // loop_exit
      _
    %282 = vsyncpa [#allocation3], 1
    %s283 = scalar_lea.sflag [#allocation3], 1
    %284 = vsyncpa %s283, 1
    %285 = vsyncpa [#allocation4], 1
    %s286 = scalar_lea.sflag [#allocation4], 1
    %287 = vsyncpa %s286, 1
    %288 = vsyncpa [#allocation7], 1
    %s289 = scalar_lea.sflag [#allocation7], 1
    %290 = vsyncpa %s289, 1

</llo_original>
